<compile_context>
chip_gen: v6e
topology: v6e:2x2x1
jax: 0.10.0
libtpu: 0.0.40
codegen_flags: <defaults>
</compile_context>

<pallas_src>
import functools

import jax
import jax.numpy as jnp
from jax import lax
from jax.experimental import pallas as pl
from jax.experimental.pallas import tpu as pltpu

H1, H2, H3, OUT = 256, 128, 64, 7
N_CONT = 2  # first 2 outputs -> tanh; remaining 5 -> softmax


def _round_up(v, m):
    return ((v + m - 1) // m) * m


def _tpu_flavor():
    """(bf16_epilogue_ok, multi_tensorcore) from the local device kind."""
    try:
        kind = jax.devices()[0].device_kind.lower()
    except Exception:
        kind = ""
    bf16_epilogue = "v5" not in kind      # v5e/v5p VALU has no packed bf16
    multi_tc = "v7" in kind               # v7x: 2 TensorCores per chip
    return bf16_epilogue, multi_tc


def make_driver_nn_kernel(bf16_epilogue):
    """Kernel factory; bf16_epilogue selects the packed-bf16 inter-layer epilogue."""

    def kernel(x_ref, w1_ref, b1_ref, w2_ref, b2_ref,
               w3_ref, b3_ref, w4_ref, b4_ref, o_ref):
        def hidden(a_bf16, w_ref, b_ref):
            # MXU: bf16 operands, f32 accumulation.
            acc = jnp.dot(a_bf16, w_ref[...], preferred_element_type=jnp.float32)
            if bf16_epilogue:
                # v6e/v7x: bias add + ReLU in packed bf16 (half the VALU ops / vregs),
                # result feeds the next matmul directly.
                h = jnp.maximum(acc.astype(jnp.bfloat16) + b_ref[...], 0.0)
                return h
            # v5-class: f32 epilogue, cast to bf16 only for the next MXU op.
            h = jnp.maximum(acc + b_ref[...], 0.0)
            return h.astype(jnp.bfloat16)

        # Layers 1-3: Linear + ReLU (Dropout == identity in eval).
        h = hidden(x_ref[...], w1_ref, b1_ref)
        h = hidden(h, w2_ref, b2_ref)
        h = hidden(h, w3_ref, b3_ref)

        # Layer 4: Linear(64, 7) -- logits and head stay f32.
        out = jnp.dot(h, w4_ref[...], preferred_element_type=jnp.float32) + b4_ref[...]

        # Head: tanh on columns [0, 2), masked softmax on columns [2, 7).
        col = lax.broadcasted_iota(jnp.int32, out.shape, 1)
        is_cont = col < N_CONT

        tanh_part = jnp.tanh(out)

        # Mask tanh lanes with -inf BEFORE max/exp: exp(-inf - finite_max) == 0,
        # so no overflow and no post-exp select.
        masked_logits = jnp.where(is_cont, -jnp.inf, out)
        gear_max = jnp.max(masked_logits, axis=1, keepdims=True)
        gear_exp = jnp.exp(masked_logits - gear_max)
        gear_sum = jnp.sum(gear_exp, axis=1, keepdims=True)
        softmax_part = gear_exp * pl.reciprocal(gear_sum, approx=True)  # EUP, not VALU

        o_ref[...] = jnp.where(is_cont, tanh_part, softmax_part).astype(o_ref.dtype)

    return kernel


def prepare_params(params, bf16_epilogue):
    """One-time (outside jit) dtype preparation: bf16 weights; biases b1-b3 in the
    epilogue dtype, b4 always f32."""
    w1, b1, w2, b2, w3, b3, w4, b4 = params
    wdt = jnp.bfloat16
    bdt = jnp.bfloat16 if bf16_epilogue else jnp.float32
    return (w1.astype(wdt), b1.astype(bdt),
            w2.astype(wdt), b2.astype(bdt),
            w3.astype(wdt), b3.astype(bdt),
            w4.astype(wdt), b4.astype(jnp.float32))


@functools.partial(jax.jit, static_argnames=("block_b", "bf16_epilogue", "multi_tc"))
def driver_nn_forward(x, prepared_params, block_b=512, bf16_epilogue=True, multi_tc=False):
    """Fused forward pass. x: (B, F) float; returns (B, 7) float32.
    prepared_params must come from prepare_params(...) (bf16 weights, pre-cast biases)."""
    w1, b1, w2, b2, w3, b3, w4, b4 = prepared_params
    B, F = x.shape

    # x is the only streaming operand -> ship bf16 to halve the per-tile DMA.
    x = x.astype(jnp.bfloat16)

    # Generation-aware batch tiling.
    if B <= 8:
        bb = B                                            # single tiny resident tile
    elif multi_tc:
        # Keep the parallel grid >= 2 and balanced so both v7x TensorCores get work.
        bb = min(block_b, _round_up(pl.cdiv(B, 2), 8))
    else:
        # Single TC (v5e/v6e): biggest tile -> fewest serial grid steps.
        bb = min(block_b, _round_up(B, 8))
    grid = (pl.cdiv(B, bb),)

    # Advisory cost hint for XLA scheduling around the custom call.
    flops = 2 * B * (F * H1 + H1 * H2 + H2 * H3 + H3 * OUT)
    weight_bytes = sum(int(a.size) * a.dtype.itemsize
                       for a in (w1, b1, w2, b2, w3, b3, w4, b4))
    cost = pl.CostEstimate(
        flops=flops,
        transcendentals=2 * OUT * B,  # tanh + exp lanes
        bytes_accessed=int(x.size) * 2 + weight_bytes + B * OUT * 4,
    )

    def rep2(i):  # weights/biases: constant index map -> fetched once, VMEM-resident
        return (0, 0)

    return pl.pallas_call(
        make_driver_nn_kernel(bf16_epilogue),
        out_shape=jax.ShapeDtypeStruct((B, OUT), jnp.float32),
        grid_spec=pltpu.PrefetchScalarGridSpec(
            num_scalar_prefetch=0,
            grid=grid,
            in_specs=[
                pl.BlockSpec((bb, F), lambda i: (i, 0)),        # x tile (bf16, streaming)
                pl.BlockSpec((F, H1), rep2),                    # w1 (bf16)
                pl.BlockSpec((1, H1), rep2),                    # b1
                pl.BlockSpec((H1, H2), rep2),                   # w2
                pl.BlockSpec((1, H2), rep2),                    # b2
                pl.BlockSpec((H2, H3), rep2),                   # w3
                pl.BlockSpec((1, H3), rep2),                    # b3
                pl.BlockSpec((H3, OUT), rep2),                  # w4
                pl.BlockSpec((1, OUT), rep2),                   # b4 (f32)
            ],
            out_specs=pl.BlockSpec((bb, OUT), lambda i: (i, 0)),
        ),
        compiler_params=pltpu.CompilerParams(
            dimension_semantics=("parallel",)),
        cost_estimate=cost,
    )(x, w1, b1, w2, b2, w3, b3, w4, b4)


def driver_nn_ref(x, params):
    """Pure-JAX f32 reference of the PyTorch forward (eval mode)."""
    w1, b1, w2, b2, w3, b3, w4, b4 = params
    h = jnp.maximum(x @ w1 + b1, 0.0)
    h = jnp.maximum(h @ w2 + b2, 0.0)
    h = jnp.maximum(h @ w3 + b3, 0.0)
    out = h @ w4 + b4
    cont = jnp.tanh(out[:, :N_CONT])
    gear = jax.nn.softmax(out[:, N_CONT:], axis=1)
    return jnp.concatenate([cont, gear], axis=1)


def init_params(key, input_size):
    """Deterministic parameter init (Kaiming-uniform-ish, like nn.Linear defaults)."""
    def linear(key, fan_in, fan_out):
        kw, kb = jax.random.split(key)
        bound = 1.0 / jnp.sqrt(jnp.float32(fan_in))
        w = jax.random.uniform(kw, (fan_in, fan_out), jnp.float32, -bound, bound)
        b = jax.random.uniform(kb, (1, fan_out), jnp.float32, -bound, bound)
        return w, b

    k1, k2, k3, k4 = jax.random.split(key, 4)
    w1, b1 = linear(k1, input_size, H1)
    w2, b2 = linear(k2, H1, H2)
    w3, b3 = linear(k3, H2, H3)
    w4, b4 = linear(k4, H3, OUT)
    return (w1, b1, w2, b2, w3, b3, w4, b4)


if __name__ == "__main__":
    key = jax.random.PRNGKey(0)
    k_x, k_p, k_x2 = jax.random.split(key, 3)

    INPUT_SIZE = 32
    params = init_params(k_p, INPUT_SIZE)

    bf16_epilogue, multi_tc = _tpu_flavor()
    # One-time dtype prep of the weights, outside jit (no per-call converts).
    prepared = prepare_params(params, bf16_epilogue)

    # Small demo batch.
    B_SMALL = 16
    x_small = jax.random.normal(k_x, (B_SMALL, INPUT_SIZE), jnp.float32)
    out_small = jax.block_until_ready(
        driver_nn_forward(x_small, prepared,
                          bf16_epilogue=bf16_epilogue, multi_tc=multi_tc))

    # Larger batch exercising the tiled path.
    B_BIG = 512
    x_big = jax.random.normal(k_x2, (B_BIG, INPUT_SIZE), jnp.float32)
    out_big = jax.block_until_ready(
        driver_nn_forward(x_big, prepared,
                          bf16_epilogue=bf16_epilogue, multi_tc=multi_tc))

    for out, x_in, b in ((out_small, x_small, B_SMALL), (out_big, x_big, B_BIG)):
        assert out.shape == (b, OUT)
        # tanh range and softmax normalization (approx reciprocal -> loose atol)
        assert bool(jnp.all(jnp.abs(out[:, :N_CONT]) <= 1.0 + 1e-3))
        assert bool(jnp.allclose(jnp.sum(out[:, N_CONT:], axis=1), 1.0, atol=1e-2))
        # agreement with f32 reference (bf16 MXU path -> loose tolerance)
        ref = driver_nn_ref(x_in, params)
        assert float(jnp.max(jnp.abs(out - ref))) < 5e-2

    print("KERNEL_OK")
</pallas_src>

<mosaic_0001>
module attributes {stable_mosaic.version = 11 : i64} {
  func.func @kernel(%arg0: i32, %arg1: memref<16x32xbf16, #tpu.memory_space<vmem>>, %arg2: memref<32x256xbf16, #tpu.memory_space<vmem>>, %arg3: memref<1x256xbf16, #tpu.memory_space<vmem>>, %arg4: memref<256x128xbf16, #tpu.memory_space<vmem>>, %arg5: memref<1x128xbf16, #tpu.memory_space<vmem>>, %arg6: memref<128x64xbf16, #tpu.memory_space<vmem>>, %arg7: memref<1x64xbf16, #tpu.memory_space<vmem>>, %arg8: memref<64x7xbf16, #tpu.memory_space<vmem>>, %arg9: memref<1x7xf32, #tpu.memory_space<vmem>>, %arg10: memref<16x7xf32, #tpu.memory_space<vmem>>) attributes {dimension_semantics = [#tpu.dimension_semantics<parallel>], iteration_bounds = array<i64: 1>, scalar_prefetch = 0 : i64, scratch_operands = 0 : i64, tpu.core_type = #tpu.core_type<tc>, window_params = [{transform_indices = @transform_0, window_bounds = array<i64: 16, 32>}, {pipeline_mode = #tpu.pipeline_mode<synchronous>, transform_indices = @transform_1, window_bounds = array<i64: 32, 256>}, {pipeline_mode = #tpu.pipeline_mode<synchronous>, transform_indices = @transform_2, window_bounds = array<i64: 1, 256>}, {pipeline_mode = #tpu.pipeline_mode<synchronous>, transform_indices = @transform_3, window_bounds = array<i64: 256, 128>}, {pipeline_mode = #tpu.pipeline_mode<synchronous>, transform_indices = @transform_4, window_bounds = array<i64: 1, 128>}, {pipeline_mode = #tpu.pipeline_mode<synchronous>, transform_indices = @transform_5, window_bounds = array<i64: 128, 64>}, {pipeline_mode = #tpu.pipeline_mode<synchronous>, transform_indices = @transform_6, window_bounds = array<i64: 1, 64>}, {pipeline_mode = #tpu.pipeline_mode<synchronous>, transform_indices = @transform_7, window_bounds = array<i64: 64, 7>}, {pipeline_mode = #tpu.pipeline_mode<synchronous>, transform_indices = @transform_8, window_bounds = array<i64: 1, 7>}, {transform_indices = @transform_9, window_bounds = array<i64: 16, 7>}]} {
    %c0 = arith.constant 0 : index
    %c0_0 = arith.constant 0 : index
    %0 = vector.load %arg1[%c0, %c0_0] : memref<16x32xbf16, #tpu.memory_space<vmem>>, vector<16x32xbf16>
    %c0_1 = arith.constant 0 : index
    %c0_2 = arith.constant 0 : index
    %1 = vector.load %arg2[%c0_1, %c0_2] : memref<32x256xbf16, #tpu.memory_space<vmem>>, vector<32x256xbf16>
    %cst = arith.constant dense<0.000000e+00> : vector<16x256xf32>
    %2 = tpu.matmul %0, %1, %cst {dimension_numbers = #tpu.dot_dimension_numbers<[1], [0], [0], [1], [0, 0, 1, 1], [], []>} : vector<16x32xbf16>, vector<32x256xbf16>, vector<16x256xf32> -> vector<16x256xf32>
    %3 = arith.truncf %2 : vector<16x256xf32> to vector<16x256xbf16>
    %c0_3 = arith.constant 0 : index
    %c0_4 = arith.constant 0 : index
    %4 = vector.load %arg3[%c0_3, %c0_4] : memref<1x256xbf16, #tpu.memory_space<vmem>>, vector<1x256xbf16>
    %5 = vector.broadcast %4 : vector<1x256xbf16> to vector<16x256xbf16>
    %6 = arith.addf %3, %5 : vector<16x256xbf16>
    %cst_5 = arith.constant 0.000000e+00 : bf16
    %7 = vector.broadcast %cst_5 : bf16 to vector<16x256xbf16>
    %8 = arith.maximumf %6, %7 : vector<16x256xbf16>
    %c0_6 = arith.constant 0 : index
    %c0_7 = arith.constant 0 : index
    %9 = vector.load %arg4[%c0_6, %c0_7] : memref<256x128xbf16, #tpu.memory_space<vmem>>, vector<256x128xbf16>
    %cst_8 = arith.constant dense<0.000000e+00> : vector<16x128xf32>
    %10 = tpu.matmul %8, %9, %cst_8 {dimension_numbers = #tpu.dot_dimension_numbers<[1], [0], [0], [1], [0, 0, 1, 1], [], []>} : vector<16x256xbf16>, vector<256x128xbf16>, vector<16x128xf32> -> vector<16x128xf32>
    %11 = arith.truncf %10 : vector<16x128xf32> to vector<16x128xbf16>
    %c0_9 = arith.constant 0 : index
    %c0_10 = arith.constant 0 : index
    %12 = vector.load %arg5[%c0_9, %c0_10] : memref<1x128xbf16, #tpu.memory_space<vmem>>, vector<1x128xbf16>
    %13 = vector.broadcast %12 : vector<1x128xbf16> to vector<16x128xbf16>
    %14 = arith.addf %11, %13 : vector<16x128xbf16>
    %cst_11 = arith.constant 0.000000e+00 : bf16
    %15 = vector.broadcast %cst_11 : bf16 to vector<16x128xbf16>
    %16 = arith.maximumf %14, %15 : vector<16x128xbf16>
    %c0_12 = arith.constant 0 : index
    %c0_13 = arith.constant 0 : index
    %17 = vector.load %arg6[%c0_12, %c0_13] : memref<128x64xbf16, #tpu.memory_space<vmem>>, vector<128x64xbf16>
    %cst_14 = arith.constant dense<0.000000e+00> : vector<16x64xf32>
    %18 = tpu.matmul %16, %17, %cst_14 {dimension_numbers = #tpu.dot_dimension_numbers<[1], [0], [0], [1], [0, 0, 1, 1], [], []>} : vector<16x128xbf16>, vector<128x64xbf16>, vector<16x64xf32> -> vector<16x64xf32>
    %19 = arith.truncf %18 : vector<16x64xf32> to vector<16x64xbf16>
    %c0_15 = arith.constant 0 : index
    %c0_16 = arith.constant 0 : index
    %20 = vector.load %arg7[%c0_15, %c0_16] : memref<1x64xbf16, #tpu.memory_space<vmem>>, vector<1x64xbf16>
    %21 = vector.broadcast %20 : vector<1x64xbf16> to vector<16x64xbf16>
    %22 = arith.addf %19, %21 : vector<16x64xbf16>
    %cst_17 = arith.constant 0.000000e+00 : bf16
    %23 = vector.broadcast %cst_17 : bf16 to vector<16x64xbf16>
    %24 = arith.maximumf %22, %23 : vector<16x64xbf16>
    %c0_18 = arith.constant 0 : index
    %c0_19 = arith.constant 0 : index
    %25 = vector.load %arg8[%c0_18, %c0_19] : memref<64x7xbf16, #tpu.memory_space<vmem>>, vector<64x7xbf16>
    %cst_20 = arith.constant dense<0.000000e+00> : vector<16x7xf32>
    %26 = tpu.matmul %24, %25, %cst_20 {dimension_numbers = #tpu.dot_dimension_numbers<[1], [0], [0], [1], [0, 0, 1, 1], [], []>} : vector<16x64xbf16>, vector<64x7xbf16>, vector<16x7xf32> -> vector<16x7xf32>
    %c0_21 = arith.constant 0 : index
    %c0_22 = arith.constant 0 : index
    %27 = vector.load %arg9[%c0_21, %c0_22] : memref<1x7xf32, #tpu.memory_space<vmem>>, vector<1x7xf32>
    %28 = vector.broadcast %27 : vector<1x7xf32> to vector<16x7xf32>
    %29 = arith.addf %26, %28 : vector<16x7xf32>
    %30 = tpu.iota {dimensions = array<i32: 1>} : vector<16x7xi32>
    %c2_i32 = arith.constant 2 : i32
    %31 = vector.broadcast %c2_i32 : i32 to vector<16x7xi32>
    %32 = arith.cmpi slt, %30, %31 : vector<16x7xi32>
    %33 = math.tanh %29 : vector<16x7xf32>
    %cst_23 = arith.constant 0xFF800000 : f32
    %34 = vector.broadcast %cst_23 : f32 to vector<16x7xf32>
    %35 = arith.select %32, %34, %29 : vector<16x7xi1>, vector<16x7xf32>
    %cst_24 = arith.constant dense<0xFF800000> : vector<16xf32>
    %36 = vector.multi_reduction <maximumf>, %35, %cst_24 [1] : vector<16x7xf32> to vector<16xf32>
    %37 = vector.shape_cast %36 : vector<16xf32> to vector<16x1xf32>
    %38 = vector.broadcast %37 : vector<16x1xf32> to vector<16x7xf32>
    %39 = arith.subf %35, %38 : vector<16x7xf32>
    %40 = math.exp %39 : vector<16x7xf32>
    %cst_25 = arith.constant dense<0.000000e+00> : vector<16xf32>
    %41 = vector.multi_reduction <add>, %40, %cst_25 [1] : vector<16x7xf32> to vector<16xf32>
    %42 = vector.shape_cast %41 : vector<16xf32> to vector<16x1xf32>
    %43 = tpu.reciprocal %42 {approx = true} : vector<16x1xf32> -> vector<16x1xf32>
    %44 = vector.broadcast %43 : vector<16x1xf32> to vector<16x7xf32>
    %45 = arith.mulf %40, %44 : vector<16x7xf32>
    %46 = arith.select %32, %33, %45 : vector<16x7xi1>, vector<16x7xf32>
    %c0_26 = arith.constant 0 : index
    %c0_27 = arith.constant 0 : index
    %47 = vector.load %arg10[%c0_26, %c0_27] : memref<16x7xf32, #tpu.memory_space<vmem>>, vector<16x7xf32>
    tpu.vector_store %arg10[%c0_26, %c0_27], %46 {strides = array<i32>} : memref<16x7xf32, #tpu.memory_space<vmem>>, vector<16x7xf32>,
    return
  }
  func.func @transform_0(%arg0: i32) -> (i32, i32) {
    %c0_i32 = arith.constant 0 : i32
    %c0_i32_0 = arith.constant 0 : i32
    return %arg0, %c0_i32 : i32, i32
  }
  func.func @transform_1(%arg0: i32) -> (i32, i32) {
    %c0_i32 = arith.constant 0 : i32
    %c0_i32_0 = arith.constant 0 : i32
    %c0_i32_1 = arith.constant 0 : i32
    return %c0_i32, %c0_i32_0 : i32, i32
  }
  func.func @transform_2(%arg0: i32) -> (i32, i32) {
    %c0_i32 = arith.constant 0 : i32
    %c0_i32_0 = arith.constant 0 : i32
    %c0_i32_1 = arith.constant 0 : i32
    return %c0_i32, %c0_i32_0 : i32, i32
  }
  func.func @transform_3(%arg0: i32) -> (i32, i32) {
    %c0_i32 = arith.constant 0 : i32
    %c0_i32_0 = arith.constant 0 : i32
    %c0_i32_1 = arith.constant 0 : i32
    return %c0_i32, %c0_i32_0 : i32, i32
  }
  func.func @transform_4(%arg0: i32) -> (i32, i32) {
    %c0_i32 = arith.constant 0 : i32
    %c0_i32_0 = arith.constant 0 : i32
    %c0_i32_1 = arith.constant 0 : i32
    return %c0_i32, %c0_i32_0 : i32, i32
  }
  func.func @transform_5(%arg0: i32) -> (i32, i32) {
    %c0_i32 = arith.constant 0 : i32
    %c0_i32_0 = arith.constant 0 : i32
    %c0_i32_1 = arith.constant 0 : i32
    return %c0_i32, %c0_i32_0 : i32, i32
  }
  func.func @transform_6(%arg0: i32) -> (i32, i32) {
    %c0_i32 = arith.constant 0 : i32
    %c0_i32_0 = arith.constant 0 : i32
    %c0_i32_1 = arith.constant 0 : i32
    return %c0_i32, %c0_i32_0 : i32, i32
  }
  func.func @transform_7(%arg0: i32) -> (i32, i32) {
    %c0_i32 = arith.constant 0 : i32
    %c0_i32_0 = arith.constant 0 : i32
    %c0_i32_1 = arith.constant 0 : i32
    return %c0_i32, %c0_i32_0 : i32, i32
  }
  func.func @transform_8(%arg0: i32) -> (i32, i32) {
    %c0_i32 = arith.constant 0 : i32
    %c0_i32_0 = arith.constant 0 : i32
    %c0_i32_1 = arith.constant 0 : i32
    return %c0_i32, %c0_i32_0 : i32, i32
  }
  func.func @transform_9(%arg0: i32) -> (i32, i32) {
    %c0_i32 = arith.constant 0 : i32
    %c0_i32_0 = arith.constant 0 : i32
    return %arg0, %c0_i32 : i32, i32
  }
}

</mosaic_0001>

<llo_original>
// kernel: driver_nn_forward.1
$region0: #{driver_nn_forward.1}
  #allocation0 [shape = 'u32[]', space=smem, size = 0x4, offset = 0x4, fixed_abs, tag = 'smem constant byte address 0x4 - core index']
  #allocation1 [shape = 'u32[144,128]{1,0:T(1,128)}', space=vmem, size = 0x12000, scoped, tag = 'internal scratch']
  %s0 = inlined_call_operand.vmem [shape: bf16[16,32], index: 0, kind: input, shape index: {}]
  %s1 = inlined_call_operand.hbm [shape: bf16[32,256], index: 1, kind: input, shape index: {}]
  %s2 = inlined_call_operand.hbm [shape: bf16[1,256], index: 2, kind: input, shape index: {}]
  %s3 = inlined_call_operand.vmem [shape: bf16[256,128], index: 3, kind: input, shape index: {}]
  %s4 = inlined_call_operand.vmem [shape: bf16[1,128], index: 4, kind: input, shape index: {}]
  %s5 = inlined_call_operand.vmem [shape: bf16[128,64], index: 5, kind: input, shape index: {}]
  %s6 = inlined_call_operand.vmem [shape: bf16[1,64], index: 6, kind: input, shape index: {}]
  %s7 = inlined_call_operand.vmem [shape: bf16[64,7], index: 7, kind: input, shape index: {}]
  %s8 = inlined_call_operand.vmem [shape: f32[1,7], index: 8, kind: input, shape index: {}]
  %s9 = inlined_call_operand.vmem [shape: f32[16,7], index: 9, kind: output, shape index: {}]
  %s10 = sld [smem:[#allocation0]]
  $region54: #{driver_nn_forward.1} parent=0
    _
  %s12 = ssub.s32 1, %s10
  %s13 = scalar_select 0, %s12, %s10
  $region1: #{driver_nn_forward.1} parent=0
    #allocation2 [shape = 'u8[16384]{0}', space=vmem, size = 0x4000, scoped, tag = 'input window, operand 1, single buffered']
    #allocation3 [shape = 's32[1]{0}', space=sflag, size = 0x4, scoped, tag = 'scoped memory for driver_nn_forward.1']
    #allocation4 [shape = 'u8[1024]{0}', space=vmem, size = 0x400, scoped, tag = 'input window, operand 2, single buffered']
    #allocation5 [shape = 's32[1]{0}', space=sflag, size = 0x4, scoped, tag = 'scoped memory for driver_nn_forward.1']
    %14 = vsyncpa [#allocation3], 0
    %15 = vsyncpa [#allocation5], 0
    // Predicated region
    $region2: #{driver_nn_forward.1} parent=1 // pred_check
      _
    $region3: #{driver_nn_forward.1} parent=1 // pred_check_branch
      %17 = sbr.rel (0) target = $region5
    $region4: #{driver_nn_forward.1} parent=1 // pred_region
      _
    $region5: #{driver_nn_forward.1} parent=1 // pred_fallthru
      _
    // Predicated region
    $region6: #{driver_nn_forward.1} parent=1 // pred_check
      _
    $region7: #{driver_nn_forward.1} parent=1 // pred_check_branch
      %19 = sbr.rel (0) target = $region9
    $region8: #{driver_nn_forward.1} parent=1 // pred_region
      %s21 = ssub.s32 512, 512
      %22 = vsyncadd [#allocation3], %s21
      %s23 = sshll.u32 [#allocation2], 4
      %s24 = int_to_ptr.vmem [resolvable:$true] %s23
      %29 = dma.hbm_to_vmem [thread:$0]  %s1, 512, %s24, [#allocation3], 128, 128, 8
    $region9: #{driver_nn_forward.1} parent=1 // pred_fallthru
      _
    // Predicated region
    $region10: #{driver_nn_forward.1} parent=1 // pred_check
      _
    $region11: #{driver_nn_forward.1} parent=1 // pred_check_branch
      %31 = sbr.rel (0) target = $region13
    $region12: #{driver_nn_forward.1} parent=1 // pred_region
      %s33 = ssub.s32 32, 32
      %34 = vsyncadd [#allocation5], %s33
      %s36 = sshll.u32 [#allocation4], 4
      %s37 = int_to_ptr.vmem [resolvable:$true] %s36
      %39 = dma.hbm_to_vmem [thread:$0]  %s2, 32, %s37, [#allocation5]
    $region13: #{driver_nn_forward.1} parent=1 // pred_fallthru
      _
    // Predicated region
    $region14: #{driver_nn_forward.1} parent=1 // pred_check
      _
    $region15: #{driver_nn_forward.1} parent=1 // pred_check_branch
      %41 = sbr.rel (0) target = $region17
    $region16: #{driver_nn_forward.1} parent=1 // pred_region
      _
    $region17: #{driver_nn_forward.1} parent=1 // pred_fallthru
      _
    // Predicated region
    $region18: #{driver_nn_forward.1} parent=1 // pred_check
      _
    $region19: #{driver_nn_forward.1} parent=1 // pred_check_branch
      %43 = sbr.rel (0) target = $region21
    $region20: #{driver_nn_forward.1} parent=1 // pred_region
      _
    $region21: #{driver_nn_forward.1} parent=1 // pred_fallthru
      _
    // Predicated region
    $region22: #{driver_nn_forward.1} parent=1 // pred_check
      _
    $region23: #{driver_nn_forward.1} parent=1 // pred_check_branch
      %45 = sbr.rel (0) target = $region25
    $region24: #{driver_nn_forward.1} parent=1 // pred_region
      _
    $region25: #{driver_nn_forward.1} parent=1 // pred_fallthru
      _
    // Predicated region
    $region26: #{driver_nn_forward.1} parent=1 // pred_check
      _
    $region27: #{driver_nn_forward.1} parent=1 // pred_check_branch
      %47 = sbr.rel (0) target = $region29
    $region28: #{driver_nn_forward.1} parent=1 // pred_region
      _
    $region29: #{driver_nn_forward.1} parent=1 // pred_fallthru
      _
    // Predicated region
    $region30: #{driver_nn_forward.1} parent=1 // pred_check
      _
    $region31: #{driver_nn_forward.1} parent=1 // pred_check_branch
      %49 = sbr.rel (0) target = $region33
    $region32: #{driver_nn_forward.1} parent=1 // pred_region
      _
    $region33: #{driver_nn_forward.1} parent=1 // pred_fallthru
      _
    // Predicated region
    $region34: #{driver_nn_forward.1} parent=1 // pred_check
      _
    $region35: #{driver_nn_forward.1} parent=1 // pred_check_branch
      %51 = sbr.rel (0) target = $region37
    $region36: #{driver_nn_forward.1} parent=1 // pred_region
      _
    $region37: #{driver_nn_forward.1} parent=1 // pred_fallthru
      _
    // Predicated region
    $region38: #{driver_nn_forward.1} parent=1 // pred_check
      _
    $region39: #{driver_nn_forward.1} parent=1 // pred_check_branch
      %53 = sbr.rel (0) target = $region41
    $region40: #{driver_nn_forward.1} parent=1 // pred_region
      %54 = dma.done [#allocation3], 512
    $region41: #{driver_nn_forward.1} parent=1 // pred_fallthru
      _
    // Predicated region
    $region42: #{driver_nn_forward.1} parent=1 // pred_check
      _
    $region43: #{driver_nn_forward.1} parent=1 // pred_check_branch
      %56 = sbr.rel (0) target = $region45
    $region44: #{driver_nn_forward.1} parent=1 // pred_region
      %57 = dma.done [#allocation5], 32
    $region45: #{driver_nn_forward.1} parent=1 // pred_fallthru
      _
    %v59 = vld [vmem:[%s0] sm:$0xf]
    %v60 = vld [vmem:[%s0 + $0x4] sm:$0xf]
    %v61 = vld [vmem:[#allocation2] sm:$0xff]
    %v62 = vld [vmem:[#allocation2 + $0x8] sm:$0xff]
    %v63 = vld [vmem:[#allocation2 + $0x10] sm:$0xff]
    %v64 = vld [vmem:[#allocation2 + $0x18] sm:$0xff]
    %v67 = vunpack.c.l.b16 %v59
    %v68 = vunpack.c.l.b16 %v60
    %v69 = vpack.c.b16 %v68, %v67
    %v74 = vunpack.c.l.b16 %v61
    %v75 = vunpack.c.h.b16 %v61
    %v76 = vunpack.c.l.b16 %v62
    %v77 = vunpack.c.h.b16 %v62
    %v78 = vunpack.c.l.b16 %v63
    %v79 = vunpack.c.h.b16 %v63
    %v80 = vunpack.c.l.b16 %v64
    %v81 = vunpack.c.h.b16 %v64
    %v82 = vpack.c.b16 %v76, %v74
    %v83 = vpack.c.b16 %v77, %v75
    %v84 = vpack.c.b16 %v80, %v78
    %v85 = vpack.c.b16 %v81, %v79
    %vm90 = vcmask 261120
    %v92 = vsel %vm90, %v69, 0
    %94 = vmatprep.subr.bf16.mxu0 0
    %95 = vmatpush1.bf16.msra.mxu0 0
    %96 = vmatprep.subr.bf16.mxu0 0
    %97 = vmatpush1.bf16.msra.mxu0 0
    %98 = vmatprep.subr.bf16.mxu0 0
    %99 = vmatpush1.bf16.msra.mxu0 0
    %100 = vmatprep.subr.bf16.mxu0 0
    %101 = vmatpush1.bf16.msra.mxu0 0
    %102 = vmatprep.subr.bf16.mxu0 0
    %103 = vmatpush1.bf16.msra.mxu0 0
    %104 = vmatprep.subr.bf16.mxu0 0
    %105 = vmatpush1.bf16.msra.mxu0 0
    %106 = vmatprep.subr.bf16.mxu0 %v85
    %107 = vmatpush1.bf16.msra.mxu0 %v84
    %108 = vmatprep.subr.bf16.mxu0 %v83
    %109 = vmatpush1.bf16.msra.mxu0 %v82
    %110 = vmatprep.subr.bf16.mxu0 0
    %111 = vmatpush2.bf16.msra.mxu0 0
    %112 = vmatprep.subr.bf16.mxu0 0
    %113 = vmatpush2.bf16.msra.mxu0 0
    %114 = vmatprep.subr.bf16.mxu0 0
    %115 = vmatpush2.bf16.msra.mxu0 0
    %116 = vmatprep.subr.bf16.mxu0 0
    %117 = vmatpush2.bf16.msra.mxu0 0
    %118 = vmatprep.subr.bf16.mxu0 0
    %119 = vmatpush2.bf16.msra.mxu0 0
    %120 = vmatprep.subr.bf16.mxu0 0
    %121 = vmatpush2.bf16.msra.mxu0 0
    %122 = vmatprep.subr.bf16.mxu0 0
    %123 = vmatpush2.bf16.msra.mxu0 0
    %124 = vmatprep.subr.bf16.mxu0 0
    %125 = vmatpush2.bf16.msra.mxu0 0
    %126 = vmatprep.mubr.bf16.mxu0 0
    %127 = vmatmul.mubr.bf16.gmra.mxu0 %v92
    %v128 = vpop.f32.mrf.mxu0
    %v129 = vadd.f32 0.0, %v128
    %v130 = vpop.f32.mrf.mxu0
    %v131 = vadd.f32 0.0, %v130
    %v132 = vpop.f32.mrf.mxu0
    %v133 = vadd.f32 0.0, %v132
    %v134 = vpop.f32.mrf.mxu0
    %v135 = vadd.f32 0.0, %v134
    %136 = vdwg.mxu0
    %v137 = vpack.c.bf16 %v133, %v129
    %v138 = vpack.c.bf16 %v135, %v131
    %v139 = vld [vmem:[#allocation4] sm:$0x3]
    %v142 = vunpack.c.l.s4 1966171168
    %v143 = vunpack.c.0.s8 %v142
    %v144 = vlaneseq
    %v145 = vshrl.u32 %v144, 7
    %v146 = vsub.s32 %v143, %v145
    %v147 = vrot.slane %v139, %v146
    %v148 = vcombine.high %v147, %v147
    %v150 = vunpack.c.l.s4 1966171168
    %v151 = vunpack.c.0.s8 %v150
    %v152 = vlaneseq
    %v153 = vshrl.u32 %v152, 7
    %v154 = vsub.s32 %v151, %v153
    %v155 = vrot.slane %v147, %v154
    %v157 = vunpack.c.l.s4 1966171168
    %v158 = vunpack.c.0.s8 %v157
    %v159 = vlaneseq
    %v160 = vshrl.u32 %v159, 7
    %v161 = vsub.s32 %v158, %v160
    %v162 = vrot.slane %v148, %v161
    %v164 = vpack.i.b16 %v155, %v155
    %v166 = vlaneseq
    %v167 = vshrl.u32 %v166, 7
    %v168 = vsub.s32 0, %v167
    %v169 = vrot.slane %v164, %v168
    %v171 = vpack.i.b16 %v162, %v162
    %v173 = vlaneseq
    %v174 = vshrl.u32 %v173, 7
    %v175 = vsub.s32 0, %v174
    %v176 = vrot.slane %v171, %v175
    %v177 = vadd.bf16 %v137, %v169
    %v178 = vadd.bf16 %v138, %v176
    %v179 = vmax.bf16 %v177, 0
    %v180 = vmax.bf16 %v178, 0
    %v181 = vld [vmem:[%s3] sm:$0xf]
    %v182 = vld [vmem:[%s3 + $0x4] sm:$0xf]
    %v183 = vld [vmem:[%s3 + $0x8] sm:$0xf]
    %v184 = vld [vmem:[%s3 + $0xc] sm:$0xf]
    %v185 = vld [vmem:[%s3 + $0x10] sm:$0xf]
    %v186 = vld [vmem:[%s3 + $0x14] sm:$0xf]
    %v187 = vld [vmem:[%s3 + $0x18] sm:$0xf]
    %v188 = vld [vmem:[%s3 + $0x1c] sm:$0xf]
    %v189 = vld [vmem:[%s3 + $0x20] sm:$0xf]
    %v190 = vld [vmem:[%s3 + $0x24] sm:$0xf]
    %v191 = vld [vmem:[%s3 + $0x28] sm:$0xf]
    %v192 = vld [vmem:[%s3 + $0x2c] sm:$0xf]
    %v193 = vld [vmem:[%s3 + $0x30] sm:$0xf]
    %v194 = vld [vmem:[%s3 + $0x34] sm:$0xf]
    %v195 = vld [vmem:[%s3 + $0x38] sm:$0xf]
    %v196 = vld [vmem:[%s3 + $0x3c] sm:$0xf]
    %v197 = vld [vmem:[%s3 + $0x40] sm:$0xf]
    %v198 = vld [vmem:[%s3 + $0x44] sm:$0xf]
    %v199 = vld [vmem:[%s3 + $0x48] sm:$0xf]
    %v200 = vld [vmem:[%s3 + $0x4c] sm:$0xf]
    %v201 = vld [vmem:[%s3 + $0x50] sm:$0xf]
    %v202 = vld [vmem:[%s3 + $0x54] sm:$0xf]
    %v203 = vld [vmem:[%s3 + $0x58] sm:$0xf]
    %v204 = vld [vmem:[%s3 + $0x5c] sm:$0xf]
    %v205 = vld [vmem:[%s3 + $0x60] sm:$0xf]
    %v206 = vld [vmem:[%s3 + $0x64] sm:$0xf]
    %v207 = vld [vmem:[%s3 + $0x68] sm:$0xf]
    %v208 = vld [vmem:[%s3 + $0x6c] sm:$0xf]
    %v209 = vld [vmem:[%s3 + $0x70] sm:$0xf]
    %v210 = vld [vmem:[%s3 + $0x74] sm:$0xf]
    %v211 = vld [vmem:[%s3 + $0x78] sm:$0xf]
    %v212 = vld [vmem:[%s3 + $0x7c] sm:$0xf]
    %v245 = vunpack.c.l.b16 %v181
    %v246 = vunpack.c.l.b16 %v182
    %v247 = vunpack.c.l.b16 %v183
    %v248 = vunpack.c.l.b16 %v184
    %v249 = vunpack.c.l.b16 %v185
    %v250 = vunpack.c.l.b16 %v186
    %v251 = vunpack.c.l.b16 %v187
    %v252 = vunpack.c.l.b16 %v188
    %v253 = vunpack.c.l.b16 %v189
    %v254 = vunpack.c.l.b16 %v190
    %v255 = vunpack.c.l.b16 %v191
    %v256 = vunpack.c.l.b16 %v192
    %v257 = vunpack.c.l.b16 %v193
    %v258 = vunpack.c.l.b16 %v194
    %v259 = vunpack.c.l.b16 %v195
    %v260 = vunpack.c.l.b16 %v196
    %v261 = vunpack.c.l.b16 %v197
    %v262 = vunpack.c.l.b16 %v198
    %v263 = vunpack.c.l.b16 %v199
    %v264 = vunpack.c.l.b16 %v200
    %v265 = vunpack.c.l.b16 %v201
    %v266 = vunpack.c.l.b16 %v202
    %v267 = vunpack.c.l.b16 %v203
    %v268 = vunpack.c.l.b16 %v204
    %v269 = vunpack.c.l.b16 %v205
    %v270 = vunpack.c.l.b16 %v206
    %v271 = vunpack.c.l.b16 %v207
    %v272 = vunpack.c.l.b16 %v208
    %v273 = vunpack.c.l.b16 %v209
    %v274 = vunpack.c.l.b16 %v210
    %v275 = vunpack.c.l.b16 %v211
    %v276 = vunpack.c.l.b16 %v212
    %v277 = vpack.c.b16 %v246, %v245
    %v278 = vpack.c.b16 %v248, %v247
    %v279 = vpack.c.b16 %v250, %v249
    %v280 = vpack.c.b16 %v252, %v251
    %v281 = vpack.c.b16 %v254, %v253
    %v282 = vpack.c.b16 %v256, %v255
    %v283 = vpack.c.b16 %v258, %v257
    %v284 = vpack.c.b16 %v260, %v259
    %v285 = vpack.c.b16 %v262, %v261
    %v286 = vpack.c.b16 %v264, %v263
    %v287 = vpack.c.b16 %v266, %v265
    %v288 = vpack.c.b16 %v268, %v267
    %v289 = vpack.c.b16 %v270, %v269
    %v290 = vpack.c.b16 %v272, %v271
    %v291 = vpack.c.b16 %v274, %v273
    %v292 = vpack.c.b16 %v276, %v275
    %309 = vmatprep.subr.bf16.mxu0 0
    %310 = vmatpush1.bf16.msra.mxu0 %v284
    %311 = vmatprep.subr.bf16.mxu0 0
    %312 = vmatpush1.bf16.msra.mxu0 %v283
    %313 = vmatprep.subr.bf16.mxu0 0
    %314 = vmatpush1.bf16.msra.mxu0 %v282
    %315 = vmatprep.subr.bf16.mxu0 0
    %316 = vmatpush1.bf16.msra.mxu0 %v281
    %317 = vmatprep.subr.bf16.mxu0 0
    %318 = vmatpush1.bf16.msra.mxu0 %v280
    %319 = vmatprep.subr.bf16.mxu0 0
    %320 = vmatpush1.bf16.msra.mxu0 %v279
    %321 = vmatprep.subr.bf16.mxu0 0
    %322 = vmatpush1.bf16.msra.mxu0 %v278
    %323 = vmatprep.subr.bf16.mxu0 0
    %324 = vmatpush1.bf16.msra.mxu0 %v277
    %325 = vmatprep.subr.bf16.mxu0 0
    %326 = vmatpush2.bf16.msra.mxu0 %v292
    %327 = vmatprep.subr.bf16.mxu0 0
    %328 = vmatpush2.bf16.msra.mxu0 %v291
    %329 = vmatprep.subr.bf16.mxu0 0
    %330 = vmatpush2.bf16.msra.mxu0 %v290
    %331 = vmatprep.subr.bf16.mxu0 0
    %332 = vmatpush2.bf16.msra.mxu0 %v289
    %333 = vmatprep.subr.bf16.mxu0 0
    %334 = vmatpush2.bf16.msra.mxu0 %v288
    %335 = vmatprep.subr.bf16.mxu0 0
    %336 = vmatpush2.bf16.msra.mxu0 %v287
    %337 = vmatprep.subr.bf16.mxu0 0
    %338 = vmatpush2.bf16.msra.mxu0 %v286
    %339 = vmatprep.subr.bf16.mxu0 0
    %340 = vmatpush2.bf16.msra.mxu0 %v285
    %341 = vmatprep.mubr.bf16.mxu0 %v180
    %342 = vmatmul.mubr.bf16.gmra.mxu0 %v179
    %v343 = vpop.f32.mrf.mxu0
    %v344 = vadd.f32 0.0, %v343
    %v345 = vpop.f32.mrf.mxu0
    %v346 = vpop.f32.mrf.mxu0
    %v347 = vadd.f32 0.0, %v346
    %v348 = vpop.f32.mrf.mxu0
    %349 = vdwg.mxu0
    %v350 = vpack.c.bf16 %v347, %v344
    %v351 = vld [vmem:[%s4] sm:$0x1]
    %v353 = vpack.i.b16 %v351, %v351
    %v355 = vlaneseq
    %v356 = vshrl.u32 %v355, 7
    %v357 = vsub.s32 0, %v356
    %v358 = vrot.slane %v353, %v357
    %v359 = vadd.bf16 %v350, %v358
    %v360 = vmax.bf16 %v359, 0
    %v361 = vld [vmem:[%s5] sm:$0xf]
    %v362 = vld [vmem:[%s5 + $0x4] sm:$0xf]
    %v363 = vld [vmem:[%s5 + $0x8] sm:$0xf]
    %v364 = vld [vmem:[%s5 + $0xc] sm:$0xf]
    %v365 = vld [vmem:[%s5 + $0x10] sm:$0xf]
    %v366 = vld [vmem:[%s5 + $0x14] sm:$0xf]
    %v367 = vld [vmem:[%s5 + $0x18] sm:$0xf]
    %v368 = vld [vmem:[%s5 + $0x1c] sm:$0xf]
    %v369 = vld [vmem:[%s5 + $0x20] sm:$0xf]
    %v370 = vld [vmem:[%s5 + $0x24] sm:$0xf]
    %v371 = vld [vmem:[%s5 + $0x28] sm:$0xf]
    %v372 = vld [vmem:[%s5 + $0x2c] sm:$0xf]
    %v373 = vld [vmem:[%s5 + $0x30] sm:$0xf]
    %v374 = vld [vmem:[%s5 + $0x34] sm:$0xf]
    %v375 = vld [vmem:[%s5 + $0x38] sm:$0xf]
    %v376 = vld [vmem:[%s5 + $0x3c] sm:$0xf]
    %v393 = vunpack.c.l.b16 %v361
    %v394 = vunpack.c.l.b16 %v362
    %v395 = vunpack.c.l.b16 %v363
    %v396 = vunpack.c.l.b16 %v364
    %v397 = vunpack.c.l.b16 %v365
    %v398 = vunpack.c.l.b16 %v366
    %v399 = vunpack.c.l.b16 %v367
    %v400 = vunpack.c.l.b16 %v368
    %v401 = vunpack.c.l.b16 %v369
    %v402 = vunpack.c.l.b16 %v370
    %v403 = vunpack.c.l.b16 %v371
    %v404 = vunpack.c.l.b16 %v372
    %v405 = vunpack.c.l.b16 %v373
    %v406 = vunpack.c.l.b16 %v374
    %v407 = vunpack.c.l.b16 %v375
    %v408 = vunpack.c.l.b16 %v376
    %v409 = vpack.c.b16 %v394, %v393
    %v410 = vpack.c.b16 %v396, %v395
    %v411 = vpack.c.b16 %v398, %v397
    %v412 = vpack.c.b16 %v400, %v399
    %v413 = vpack.c.b16 %v402, %v401
    %v414 = vpack.c.b16 %v404, %v403
    %v415 = vpack.c.b16 %v406, %v405
    %v416 = vpack.c.b16 %v408, %v407
    %425 = vmatprep.subr.bf16.mxu0 0
    %426 = vmatpush1.bf16.msra.mxu0 %v416
    %427 = vmatprep.subr.bf16.mxu0 0
    %428 = vmatpush1.bf16.msra.mxu0 %v415
    %429 = vmatprep.subr.bf16.mxu0 0
    %430 = vmatpush1.bf16.msra.mxu0 %v414
    %431 = vmatprep.subr.bf16.mxu0 0
    %432 = vmatpush1.bf16.msra.mxu0 %v413
    %433 = vmatprep.subr.bf16.mxu0 0
    %434 = vmatpush1.bf16.msra.mxu0 %v412
    %435 = vmatprep.subr.bf16.mxu0 0
    %436 = vmatpush1.bf16.msra.mxu0 %v411
    %437 = vmatprep.subr.bf16.mxu0 0
    %438 = vmatpush1.bf16.msra.mxu0 %v410
    %439 = vmatprep.subr.bf16.mxu0 0
    %440 = vmatpush1.bf16.msra.mxu0 %v409
    %441 = vmatprep.subr.bf16.mxu0 0
    %442 = vmatpush2.bf16.msra.mxu0 0
    %443 = vmatprep.subr.bf16.mxu0 0
    %444 = vmatpush2.bf16.msra.mxu0 0
    %445 = vmatprep.subr.bf16.mxu0 0
    %446 = vmatpush2.bf16.msra.mxu0 0
    %447 = vmatprep.subr.bf16.mxu0 0
    %448 = vmatpush2.bf16.msra.mxu0 0
    %449 = vmatprep.subr.bf16.mxu0 0
    %450 = vmatpush2.bf16.msra.mxu0 0
    %451 = vmatprep.subr.bf16.mxu0 0
    %452 = vmatpush2.bf16.msra.mxu0 0
    %453 = vmatprep.subr.bf16.mxu0 0
    %454 = vmatpush2.bf16.msra.mxu0 0
    %455 = vmatprep.subr.bf16.mxu0 0
    %456 = vmatpush2.bf16.msra.mxu0 0
    %457 = vmatprep.mubr.bf16.mxu0 0
    %458 = vmatmul.mubr.bf16.gmra.mxu0 %v360
    %v459 = vpop.f32.mrf.mxu0
    %v460 = vadd.f32 0.0, %v459
    %v461 = vpop.f32.mrf.mxu0
    %v462 = vpop.f32.mrf.mxu0
    %v463 = vadd.f32 0.0, %v462
    %v464 = vpop.f32.mrf.mxu0
    %465 = vdwg.mxu0
    %v466 = vpack.c.bf16 %v463, %v460
    %v467 = vld [vmem:[%s6] sm:$0x1]
    %v469 = vpack.i.b16 %v467, %v467
    %v471 = vlaneseq
    %v472 = vshrl.u32 %v471, 7
    %v473 = vsub.s32 0, %v472
    %v474 = vrot.slane %v469, %v473
    %v475 = vadd.bf16 %v466, %v474
    %v476 = vmax.bf16 %v475, 0
    %v477 = vld [vmem:[%s7] sm:$0xf]
    %v478 = vld [vmem:[%s7 + $0x4] sm:$0xf]
    %v479 = vld [vmem:[%s7 + $0x8] sm:$0xf]
    %v480 = vld [vmem:[%s7 + $0xc] sm:$0xf]
    %v481 = vld [vmem:[%s7 + $0x10] sm:$0xf]
    %v482 = vld [vmem:[%s7 + $0x14] sm:$0xf]
    %v483 = vld [vmem:[%s7 + $0x18] sm:$0xf]
    %v484 = vld [vmem:[%s7 + $0x1c] sm:$0xf]
    %v485 = vld [vmem:[%s8] sm:$0x1]
    %v487 = vlaneseq
    %v488 = vshrl.u32 %v487, 7
    %v489 = vsub.s32 0, %v488
    %v490 = vrot.slane %v485, %v489
    %v500 = vunpack.c.l.b16 %v477
    %v501 = vunpack.c.l.b16 %v478
    %v502 = vunpack.c.l.b16 %v479
    %v503 = vunpack.c.l.b16 %v480
    %v504 = vunpack.c.l.b16 %v481
    %v505 = vunpack.c.l.b16 %v482
    %v506 = vunpack.c.l.b16 %v483
    %v507 = vunpack.c.l.b16 %v484
    %v508 = vpack.c.b16 %v501, %v500
    %v509 = vpack.c.b16 %v503, %v502
    %v510 = vpack.c.b16 %v505, %v504
    %v511 = vpack.c.b16 %v507, %v506
    %vm516 = vcmask 523264
    %v518 = vsel %vm516, %v476, 0
    %520 = vmatprep.subr.bf16.mxu0 0
    %521 = vmatpush1.bf16.msra.mxu0 0
    %522 = vmatprep.subr.bf16.mxu0 0
    %523 = vmatpush1.bf16.msra.mxu0 0
    %524 = vmatprep.subr.bf16.mxu0 0
    %525 = vmatpush1.bf16.msra.mxu0 0
    %526 = vmatprep.subr.bf16.mxu0 0
    %527 = vmatpush1.bf16.msra.mxu0 0
    %528 = vmatprep.subr.bf16.mxu0 0
    %529 = vmatpush1.bf16.msra.mxu0 %v511
    %530 = vmatprep.subr.bf16.mxu0 0
    %531 = vmatpush1.bf16.msra.mxu0 %v510
    %532 = vmatprep.subr.bf16.mxu0 0
    %533 = vmatpush1.bf16.msra.mxu0 %v509
    %534 = vmatprep.subr.bf16.mxu0 0
    %535 = vmatpush1.bf16.msra.mxu0 %v508
    %536 = vmatprep.subr.bf16.mxu0 0
    %537 = vmatpush2.bf16.msra.mxu0 0
    %538 = vmatprep.subr.bf16.mxu0 0
    %539 = vmatpush2.bf16.msra.mxu0 0
    %540 = vmatprep.subr.bf16.mxu0 0
    %541 = vmatpush2.bf16.msra.mxu0 0
    %542 = vmatprep.subr.bf16.mxu0 0
    %543 = vmatpush2.bf16.msra.mxu0 0
    %544 = vmatprep.subr.bf16.mxu0 0
    %545 = vmatpush2.bf16.msra.mxu0 0
    %546 = vmatprep.subr.bf16.mxu0 0
    %547 = vmatpush2.bf16.msra.mxu0 0
    %548 = vmatprep.subr.bf16.mxu0 0
    %549 = vmatpush2.bf16.msra.mxu0 0
    %550 = vmatprep.subr.bf16.mxu0 0
    %551 = vmatpush2.bf16.msra.mxu0 0
    %552 = vmatprep.mubr.bf16.mxu0 0
    %553 = vmatmul.mubr.bf16.gmra.mxu0 %v518
    %v554 = vpop.f32.mrf.mxu0
    %v555 = vadd.f32 %v490, %v554
    %v556 = vpop.f32.mrf.mxu0
    %v557 = vpop.f32.mrf.mxu0
    %v558 = vadd.f32 %v490, %v557
    %v559 = vpop.f32.mrf.mxu0
    %560 = vdwg.mxu0
    %v561 = vlaneseq
    %v562 = vand.u32 %v561, 127
    %vm563 = vcmp.lt.s32.totalorder %v562, 2
    %v564 = vtanh.pop %v555
    %v565 = vtanh.pop %v558
    %v566 = vsel %vm563, -inf, %v555
    %v567 = vsel %vm563, -inf, %v558
    %vm568 = vcmask 56320
    %v569 = vsel %vm568, %v566, -inf
    %570 = vmax.xlane.f32.xlu0 %v569
    %v571 = vpop.xlane.xlu0 %570
    %v572 = vsel %vm568, %v567, -inf
    %573 = vmax.xlane.f32.xlu0 %v572
    %v574 = vpop.xlane.xlu0 %573
    %v575 = vsub.f32 %v566, %v571
    %v576 = vsub.f32 %v567, %v574
    %v577 = vmul.f32 %v575, 1.442695
    %v578 = vpow.pop %v577
    %v579 = vmul.f32 %v576, 1.442695
    %v580 = vpow.pop %v579
    %v581 = vsel %vm568, %v578, 0.0
    %582 = vadd.xlane.f32.xlu0 %v581
    %v583 = vpop.xlane.xlu0 %582
    %v584 = vsel %vm568, %v580, 0.0
    %585 = vadd.xlane.f32.xlu0 %v584
    %v586 = vpop.xlane.xlu0 %585
    %v587 = vrcp.pop %v583
    %v588 = vrcp.pop %v586
    %v589 = vmul.f32 %v578, %v587
    %v590 = vmul.f32 %v580, %v588
    %v591 = vsel %vm563, %v564, %v589
    %v592 = vsel %vm563, %v565, %v590
    %593 = vst.msk [vmem:[%s9] sm:$0xff] %vm568, %v591
    %594 = vst.msk [vmem:[%s9 + $0x8] sm:$0xff] %vm568, %v592
    // Predicated region
    $region46: #{driver_nn_forward.1} parent=1 // pred_check
      _
    $region47: #{driver_nn_forward.1} parent=1 // pred_check_branch
      %596 = sbr.rel (0) target = $region49
    $region48: #{driver_nn_forward.1} parent=1 // pred_region
      _
    $region49: #{driver_nn_forward.1} parent=1 // pred_fallthru
      _
    // Predicated region
    $region50: #{driver_nn_forward.1} parent=1 // pred_check
      _
    $region51: #{driver_nn_forward.1} parent=1 // pred_check_branch
      %598 = sbr.rel (0) target = $region53
    $region52: #{driver_nn_forward.1} parent=1 // pred_region
      _
    $region53: #{driver_nn_forward.1} parent=1 // pred_fallthru
      _
    %599 = vsyncpa [#allocation3], 1
    %600 = vsyncpa [#allocation5], 1

</llo_original>
